<compile_context>
chip_gen: v5e
topology: v5e:2x2
jax: 0.10.0
libtpu: 0.0.40
codegen_flags: <defaults>
</compile_context>

<pallas_src>
import numpy as np

import jax
import jax.numpy as jnp
from jax.experimental import pallas as pl
from jax.experimental.pallas import tpu as pltpu


def _round_up(n, m):
    return -(-n // m) * m


def _build_filter_matrix(seq_len, kernel_size, stride):
    """(S_out, S) float32 matrix A such that A @ x == moving_avg(x) per channel.

    Encodes the edge-replicated padding of (K-1)//2 rows on each side and the
    stride-`stride` average pooling window of size `kernel_size`.
    """
    pad = (kernel_size - 1) // 2
    padded_len = seq_len + 2 * pad
    out_len = (padded_len - kernel_size) // stride + 1
    src = np.clip(np.arange(padded_len) - pad, 0, seq_len - 1)
    a = np.zeros((out_len, seq_len), dtype=np.float32)
    inv_k = 1.0 / kernel_size
    for i in range(out_len):
        for p in range(i * stride, i * stride + kernel_size):
            a[i, src[p]] += inv_k
    return jnp.asarray(a, dtype=jnp.float32)


def _moving_avg_kernel(a_ref, x_ref, o_ref):
    # One MXU matmul: (S_out, S) f32 @ (S, LANE_TILE) -> (S_out, LANE_TILE).
    o_ref[...] = jnp.dot(
        a_ref[...], x_ref[...].astype(jnp.float32),
        preferred_element_type=jnp.float32).astype(o_ref.dtype)


def _pick_lane_tile_divisor(c, target, batch, min_total_steps=2):
    """Largest multiple-of-128 divisor of `c` that is <= target, preferring
    tiles that keep batch * (c // tile) >= min_total_steps (v7x: 2 cores)."""
    divisors = [d for d in range(128, c + 1, 128) if c % d == 0]
    ok = [d for d in divisors
          if d <= target and batch * (c // d) >= min_total_steps]
    if ok:
        return max(ok)
    ok = [d for d in divisors if d <= target]
    if ok:
        return max(ok)
    return min(divisors)


def _vmem_limit_bytes(s, s_out, lane_tile, itemsize):
    # Double-buffered x and out blocks + (conservatively double-buffered) A,
    # with 2x headroom; clamp under v7x's 64 MiB physical VMEM.
    footprint = 2 * (s + s_out) * lane_tile * itemsize + 2 * s_out * s * 4
    return int(min(max(2 * footprint, 4 * 1024 * 1024), 48 * 1024 * 1024))


def moving_avg_forward(x, *, kernel_size=25, stride=1, target_lane_tile=2048):
    """x: (B, S, C) -> (B, S_out, C) moving average (edge-replicated)."""
    B, S, C = x.shape
    a = _build_filter_matrix(S, kernel_size, stride)          # (S_out, S) f32
    s_out = a.shape[0]
    itemsize = jnp.dtype(x.dtype).itemsize

    if C % 128 == 0:
        # ---- Native-layout path: no transposes, no padding copies. ----
        lane_tile = _pick_lane_tile_divisor(C, target_lane_tile, B)
        grid = (B, C // lane_tile)
        return pl.pallas_call(
            _moving_avg_kernel,
            out_shape=jax.ShapeDtypeStruct((B, s_out, C), x.dtype),
            grid_spec=pltpu.PrefetchScalarGridSpec(
                num_scalar_prefetch=0,
                grid=grid,
                in_specs=[
                    # Filter matrix: resident across all grid steps, f32.
                    pl.BlockSpec((s_out, S), lambda b, c: (0, 0)),
                    # One (S, lane_tile) slab per (batch, lane-chunk) step;
                    # the batch dim is squeezed out of the kernel view.
                    pl.BlockSpec((None, S, lane_tile), lambda b, c: (b, 0, c)),
                ],
                out_specs=pl.BlockSpec(
                    (None, s_out, lane_tile), lambda b, c: (b, 0, c)),
            ),
            compiler_params=pltpu.CompilerParams(
                dimension_semantics=("parallel", "parallel"),
                vmem_limit_bytes=_vmem_limit_bytes(S, s_out, lane_tile,
                                                   itemsize),
            ),
            cost_estimate=pl.CostEstimate(
                flops=2 * s_out * S * B * C,
                transcendentals=0,
                bytes_accessed=(S * B * C + s_out * B * C) * itemsize
                + s_out * S * 4,
            ),
        )(a, x)

    # ---- Fallback path (C not lane-aligned): fold batch into lane axis. ----
    n = B * C
    n128 = _round_up(n, 128)
    lane_tile = min(target_lane_tile, n128)
    if n128 >= 2 * 128:
        # Keep >= 2 grid steps so both v7x TensorCores get work.
        lane_tile = min(lane_tile, _round_up(-(-n128 // 2), 128))
    lane_tile = max(128, _round_up(lane_tile, 128))
    n_padded = _round_up(n, lane_tile)

    x2 = jnp.transpose(x, (1, 0, 2)).reshape(S, n)             # (S, B*C)
    if n_padded != n:
        x2 = jnp.pad(x2, ((0, 0), (0, n_padded - n)))
    grid = (n_padded // lane_tile,)

    out2 = pl.pallas_call(
        _moving_avg_kernel,
        out_shape=jax.ShapeDtypeStruct((s_out, n_padded), x.dtype),
        grid_spec=pltpu.PrefetchScalarGridSpec(
            num_scalar_prefetch=0,
            grid=grid,
            in_specs=[
                pl.BlockSpec((s_out, S), lambda j: (0, 0)),
                pl.BlockSpec((S, lane_tile), lambda j: (0, j)),
            ],
            out_specs=pl.BlockSpec((s_out, lane_tile), lambda j: (0, j)),
        ),
        compiler_params=pltpu.CompilerParams(
            dimension_semantics=("parallel",),
            vmem_limit_bytes=_vmem_limit_bytes(S, s_out, lane_tile, itemsize),
        ),
        cost_estimate=pl.CostEstimate(
            flops=2 * s_out * S * n_padded,
            transcendentals=0,
            bytes_accessed=(S * n_padded + s_out * n_padded) * itemsize
            + s_out * S * 4,
        ),
    )(a, x2)

    out = out2[:, :n].reshape(s_out, B, C)
    return jnp.transpose(out, (1, 0, 2))                       # (B, S_out, C)


def reference_moving_avg(x, kernel_size, stride):
    """Pure-JAX reference replicating the PyTorch moving_avg.forward."""
    pad = (kernel_size - 1) // 2
    front = jnp.repeat(x[:, :1, :], pad, axis=1)
    end = jnp.repeat(x[:, -1:, :], pad, axis=1)
    padded = jnp.concatenate([front, x, end], axis=1)          # (B, S+2*pad, C)
    out_len = (padded.shape[1] - kernel_size) // stride + 1
    windows = [
        padded[:, i * stride:i * stride + kernel_size, :].mean(axis=1)
        for i in range(out_len)
    ]
    return jnp.stack(windows, axis=1)                          # (B, S_out, C)


if __name__ == "__main__":
    key = jax.random.PRNGKey(0)

    # Primary case: lane-aligned channels -> native-layout path (no transposes).
    B, SEQ_LEN, CHANNELS = 2, 96, 128
    KERNEL_SIZE, STRIDE = 25, 1
    x = jax.random.normal(key, (B, SEQ_LEN, CHANNELS), dtype=jnp.float32)
    out = jax.block_until_ready(
        moving_avg_forward(x, kernel_size=KERNEL_SIZE, stride=STRIDE))
    ref = reference_moving_avg(x, KERNEL_SIZE, STRIDE)
    assert out.shape == ref.shape, (out.shape, ref.shape)
    assert jnp.allclose(out, ref, atol=1e-4, rtol=1e-4), "native path mismatch"

    # Secondary case: non-aligned channels -> fallback (folded lane) path.
    key2 = jax.random.PRNGKey(1)
    x2 = jax.random.normal(key2, (3, 40, 7), dtype=jnp.float32)
    out2 = jax.block_until_ready(
        moving_avg_forward(x2, kernel_size=KERNEL_SIZE, stride=STRIDE))
    ref2 = reference_moving_avg(x2, KERNEL_SIZE, STRIDE)
    assert out2.shape == ref2.shape, (out2.shape, ref2.shape)
    assert jnp.allclose(out2, ref2, atol=1e-4, rtol=1e-4), "fallback mismatch"

    print("KERNEL_OK")
</pallas_src>

<mosaic_0001>
module attributes {stable_mosaic.version = 11 : i64} {
  func.func @_moving_avg_kernel(%arg0: i32, %arg1: i32, %arg2: memref<96x96xf32, #tpu.memory_space<vmem>>, %arg3: memref<1x96x128xf32, #tpu.memory_space<vmem>>, %arg4: memref<1x96x128xf32, #tpu.memory_space<vmem>>) attributes {dimension_semantics = [#tpu.dimension_semantics<parallel>, #tpu.dimension_semantics<parallel>], iteration_bounds = array<i64: 2, 1>, scalar_prefetch = 0 : i64, scratch_operands = 0 : i64, tpu.core_type = #tpu.core_type<tc>, window_params = [{pipeline_mode = #tpu.pipeline_mode<synchronous>, transform_indices = @transform_0, window_bounds = array<i64: 96, 96>}, {transform_indices = @transform_1, window_bounds = array<i64: 1, 96, 128>}, {transform_indices = @transform_2, window_bounds = array<i64: 1, 96, 128>}]} {
    %c0 = arith.constant 0 : index
    %c0_0 = arith.constant 0 : index
    %0 = vector.load %arg2[%c0, %c0_0] : memref<96x96xf32, #tpu.memory_space<vmem>>, vector<96x96xf32>
    %c0_1 = arith.constant 0 : index
    %c0_2 = arith.constant 0 : index
    %c0_3 = arith.constant 0 : index
    %1 = vector.load %arg3[%c0_1, %c0_2, %c0_3] : memref<1x96x128xf32, #tpu.memory_space<vmem>>, vector<1x96x128xf32>
    %2 = vector.shape_cast %1 : vector<1x96x128xf32> to vector<96x128xf32>
    %cst = arith.constant dense<0.000000e+00> : vector<96x128xf32>
    %3 = tpu.matmul %0, %2, %cst {dimension_numbers = #tpu.dot_dimension_numbers<[1], [0], [0], [1], [0, 0, 1, 1], [], []>} : vector<96x96xf32>, vector<96x128xf32>, vector<96x128xf32> -> vector<96x128xf32>
    %c0_4 = arith.constant 0 : index
    %c0_5 = arith.constant 0 : index
    %c0_6 = arith.constant 0 : index
    %4 = vector.load %arg4[%c0_4, %c0_5, %c0_6] : memref<1x96x128xf32, #tpu.memory_space<vmem>>, vector<1x96x128xf32>
    %5 = vector.shape_cast %4 : vector<1x96x128xf32> to vector<96x128xf32>
    %6 = vector.shape_cast %3 : vector<96x128xf32> to vector<1x96x128xf32>
    tpu.vector_store %arg4[%c0_4, %c0_5, %c0_6], %6 {strides = array<i32>} : memref<1x96x128xf32, #tpu.memory_space<vmem>>, vector<1x96x128xf32>,
    return
  }
  func.func @transform_0(%arg0: i32, %arg1: i32) -> (i32, i32) {
    %c0_i32 = arith.constant 0 : i32
    %c0_i32_0 = arith.constant 0 : i32
    %c0_i32_1 = arith.constant 0 : i32
    return %c0_i32, %c0_i32_0 : i32, i32
  }
  func.func @transform_1(%arg0: i32, %arg1: i32) -> (i32, i32, i32) {
    %c0_i32 = arith.constant 0 : i32
    %c0_i32_0 = arith.constant 0 : i32
    return %arg0, %c0_i32, %arg1 : i32, i32, i32
  }
  func.func @transform_2(%arg0: i32, %arg1: i32) -> (i32, i32, i32) {
    %c0_i32 = arith.constant 0 : i32
    %c0_i32_0 = arith.constant 0 : i32
    return %arg0, %c0_i32, %arg1 : i32, i32, i32
  }
}

</mosaic_0001>

<llo_original>
// kernel: tpu_custom_call.1
$region0: #{tpu_custom_call.1}
  #allocation0 [shape = 'u32[]', space=smem, size = 0x4, offset = 0x4, fixed_abs, tag = 'smem constant byte address 0x4 - core index']
  #allocation1 [shape = 'u32[72,128]{1,0:T(1,128)}', space=vmem, size = 0x9000, scoped, tag = 'internal scratch']
  %s0 = inlined_call_operand.hbm [shape: f32[96,96], index: 0, kind: input, shape index: {}]
  %s1 = inlined_call_operand.hbm [shape: f32[2,96,128], index: 1, kind: input, shape index: {}]
  %s2 = inlined_call_operand.hbm [shape: f32[2,96,128], index: 2, kind: output, shape index: {}]
  %s3 = sld [smem:[#allocation0]]
  $region49: #{tpu_custom_call.1} parent=0
    _
  %s5 = ssub.s32 1, %s3
  %s6 = scalar_select 0, %s5, %s3
  $region1: #{tpu_custom_call.1} parent=0
    #allocation2 [shape = 'u8[49152]{0}', space=vmem, size = 0xc000, scoped, tag = 'input window, operand 0, single buffered']
    #allocation3 [shape = 's32[2]{0}', space=sflag, size = 0x8, scoped, tag = 'scoped memory for tpu_custom_call.1']
    #allocation4 [shape = 's32[2]{0}', space=sflag, size = 0x8, scoped, tag = 'scoped memory for tpu_custom_call.1']
    #allocation5 [shape = 'u8[98304]{0}', space=vmem, size = 0x18000, scoped, tag = 'input window, operand 1']
    #allocation6 [shape = 's32[2]{0}', space=sflag, size = 0x8, scoped, tag = 'scoped memory for tpu_custom_call.1']
    #allocation7 [shape = 'u8[98304]{0}', space=vmem, size = 0x18000, scoped, tag = 'output window, operand 0']
    %7 = vsyncpa [#allocation3], 0
    %8 = vsyncpa [#allocation6], 0
    %s9 = scalar_lea.sflag [#allocation6], 1
    %10 = vsyncpa %s9, 0
    %11 = vsyncpa [#allocation4], 0
    %s12 = scalar_lea.sflag [#allocation4], 1
    %13 = vsyncpa %s12, 0
    loop: start=0, step=1, limit=4
    $region2: #{tpu_custom_call.1} parent=1 // loop_pre_header
      _
    $region3: #{tpu_custom_call.1} parent=1 // loop_header
      %s15 = sphi 0, %s19
      %p16 = scmp.ge.s32.totalorder %s15, 4
      %s22 = sphi 0, %s34
      %s23 = sphi 0, %s30
      %s24 = sphi 0, %s22
      %s25 = sphi 0, %s23
      %s26 = sphi 0, %s24
      %s27 = sphi 0, %s25
      %s35 = sphi 0, %s35
      %s37 = sphi 0, %s35
      %s38 = sphi 0, %s37
      %s52 = sphi 0, %s38
      %s60 = sphi 0, %s62
      %s63 = sphi 0, %s60
      %s64 = sphi 0, %s63
      %s80 = sphi 0, %s64
      %s88 = sphi 0, %s90
      %s91 = sphi 0, %s88
      %s92 = sphi 0, %s91
      %s108 = sphi 0, %s92
    $region4: #{tpu_custom_call.1} parent=1 // loop_header_branch
      %18 = sbr.rel (%p16) target = $region8
    $region5: #{tpu_custom_call.1} parent=1 // loop_body
      %s20 = ssub.s32 %s15, 1
      %s21 = ssub.s32 %s15, 2
      %s28 = sadd.s32 1, %s23
      %p29 = scmp.ge.s32.totalorder %s28, 1
      %s30 = scalar_select %p29, 0, %s28
      %s31 = sadd.s32 1, %s22
      %s32 = scalar_select %p29, %s31, %s22
      %p33 = scmp.ge.s32.totalorder %s32, 2
      %s34 = scalar_select %p33, 0, %s32
      %s36 = sadd.s32 %s35, 1
      %p39 = scmp.eq.s32.totalorder %s15, 1
      %p40 = scmp.ne.s32.totalorder %s35, %s37
      %p41 = scmp.eq.s32.totalorder %s15, 0
      %p42 = por %p40, %p41
      %p43 = scmp.ne.s32.totalorder %s35, %s37
      %p44 = scmp.eq.s32.totalorder %s20, 1
      %p45 = por %p43, %p44
      %p46 = scmp.ne.s32.totalorder %s37, %s38
      %p47 = scmp.eq.s32.totalorder %s20, 0
      %p48 = por %p46, %p47
      %p49 = scmp.ne.s32.totalorder %s37, %s38
      %p50 = scmp.eq.s32.totalorder %s21, 1
      %p51 = por %p49, %p50
      %p53 = scmp.ne.s32.totalorder %s38, %s52
      %p54 = scmp.eq.s32.totalorder %s21, 0
      %p55 = por %p53, %p54
      %s56 = ssub.s32 %s22, %s34
      %s57 = ssub.s32 %s23, %s30
      %s58 = sor.u32 %s56, %s57
      %p59 = scmp.eq.s32.totalorder %s58, 0
      %s61 = sadd.s32 %s60, 1
      %s62 = scalar_select %p59, %s60, %s61
      %p65 = pneg %p59
      %p66 = scmp.eq.s32.totalorder %s15, 1
      %p67 = por %p65, %p66
      %p68 = scmp.ne.s32.totalorder %s60, %s63
      %p69 = scmp.eq.s32.totalorder %s15, 0
      %p70 = por %p68, %p69
      %p71 = scmp.ne.s32.totalorder %s60, %s63
      %p72 = scmp.eq.s32.totalorder %s20, 1
      %p73 = por %p71, %p72
      %p74 = scmp.ne.s32.totalorder %s63, %s64
      %p75 = scmp.eq.s32.totalorder %s20, 0
      %p76 = por %p74, %p75
      %p77 = scmp.ne.s32.totalorder %s63, %s64
      %p78 = scmp.eq.s32.totalorder %s21, 1
      %p79 = por %p77, %p78
      %p81 = scmp.ne.s32.totalorder %s64, %s80
      %p82 = scmp.eq.s32.totalorder %s21, 0
      %p83 = por %p81, %p82
      %s84 = ssub.s32 %s22, %s34
      %s85 = ssub.s32 %s23, %s30
      %s86 = sor.u32 %s84, %s85
      %p87 = scmp.eq.s32.totalorder %s86, 0
      %s89 = sadd.s32 %s88, 1
      %s90 = scalar_select %p87, %s88, %s89
      %p93 = pneg %p87
      %p94 = scmp.eq.s32.totalorder %s15, 1
      %p95 = por %p93, %p94
      %p96 = scmp.ne.s32.totalorder %s88, %s91
      %p97 = scmp.eq.s32.totalorder %s15, 0
      %p98 = por %p96, %p97
      %p99 = scmp.ne.s32.totalorder %s88, %s91
      %p100 = scmp.eq.s32.totalorder %s20, 1
      %p101 = por %p99, %p100
      %p102 = scmp.ne.s32.totalorder %s91, %s92
      %p103 = scmp.eq.s32.totalorder %s20, 0
      %p104 = por %p102, %p103
      %p105 = scmp.ne.s32.totalorder %s91, %s92
      %p106 = scmp.eq.s32.totalorder %s21, 1
      %p107 = por %p105, %p106
      %p109 = scmp.ne.s32.totalorder %s92, %s108
      %p110 = scmp.eq.s32.totalorder %s21, 0
      %p111 = por %p109, %p110
      %p112 = scmp.le.s32.totalorder 1, %s15
      %p113 = scmp.lt.s32.totalorder %s15, 3
      %p114 = pnand %p112, %p113
      %p115 = pneg %p114
      // Predicated region
      $region9: #{tpu_custom_call.1} parent=5 // pred_check
        _
      $region10: #{tpu_custom_call.1} parent=5 // pred_check_branch
        %117 = sbr.rel (%p114) target = $region12
      $region11: #{tpu_custom_call.1} parent=5 // pred_region
        %s118 = ssub.s32 %s15, 1
        // Predicated region
        $region13: #{tpu_custom_call.1} parent=11 // pred_check
          %p119 = pneg %p48
        $region14: #{tpu_custom_call.1} parent=11 // pred_check_branch
          %121 = sbr.rel (%p119) target = $region16
        $region15: #{tpu_custom_call.1} parent=11 // pred_region
          %123 = vsyncadd [#allocation3], 0
          %s124 = sshll.u32 %s0, 4
          %s125 = int_to_ptr.hbm [resolvable:$true] %s124
          %s126 = sshll.u32 [#allocation2], 4
          %s127 = int_to_ptr.vmem [resolvable:$true] %s126
          %132 = dma.hbm_to_vmem [thread:$0]  %s125, 1536, %s127, [#allocation3], 128, 128, 8
        $region16: #{tpu_custom_call.1} parent=11 // pred_fallthru
          _
      $region12: #{tpu_custom_call.1} parent=5 // pred_fallthru
        _
      %p133 = scmp.lt.s32.totalorder %s15, 2
      // Predicated region
      $region17: #{tpu_custom_call.1} parent=5 // pred_check
        %p134 = pneg %p133
      $region18: #{tpu_custom_call.1} parent=5 // pred_check_branch
        %136 = sbr.rel (%p134) target = $region20
      $region19: #{tpu_custom_call.1} parent=5 // pred_region
        // Predicated region
        $region21: #{tpu_custom_call.1} parent=19 // pred_check
          %p137 = pneg %p70
        $region22: #{tpu_custom_call.1} parent=19 // pred_check_branch
          %139 = sbr.rel (%p137) target = $region24
        $region23: #{tpu_custom_call.1} parent=19 // pred_region
          %s140 = sand.u32 %s60, 1
          %s141 = scalar_lea.sflag [#allocation6], %s140
          %s142 = sand.u32 %s60, 1
          %s143 = smul.addr %s142, 96
          %s144 = scalar_lea.vmem [#allocation5], %s143
          %146 = vsyncadd %s141, 0
          %s147 = smul.addr %s22, 12
          %s148 = sadd.s32 %s23, %s147
          %s149 = smul.addr %s148, 8
          %s150 = scalar_lea.hbm %s1, %s149
          %s151 = sshll.u32 %s150, 4
          %s152 = int_to_ptr.hbm [resolvable:$true] %s151
          %s153 = sshll.u32 %s144, 4
          %s154 = int_to_ptr.vmem [resolvable:$true] %s153
          %159 = dma.hbm_to_vmem [thread:$0]  %s152, 1536, %s154, %s141, 128, 128, 8
        $region24: #{tpu_custom_call.1} parent=19 // pred_fallthru
          _
      $region20: #{tpu_custom_call.1} parent=5 // pred_fallthru
        _
      %p160 = scmp.le.s32.totalorder 1, %s15
      %p161 = scmp.lt.s32.totalorder %s15, 3
      %p162 = pnand %p160, %p161
      %p163 = pneg %p162
      // Predicated region
      $region25: #{tpu_custom_call.1} parent=5 // pred_check
        _
      $region26: #{tpu_custom_call.1} parent=5 // pred_check_branch
        %165 = sbr.rel (%p162) target = $region28
      $region27: #{tpu_custom_call.1} parent=5 // pred_region
        %s166 = ssub.s32 %s15, 1
        // Predicated region
        $region29: #{tpu_custom_call.1} parent=27 // pred_check
          %p167 = pneg %p48
        $region30: #{tpu_custom_call.1} parent=27 // pred_check_branch
          %169 = sbr.rel (%p167) target = $region32
        $region31: #{tpu_custom_call.1} parent=27 // pred_region
          %171 = dma.done [#allocation3], 1536
        $region32: #{tpu_custom_call.1} parent=27 // pred_fallthru
          _
        %s172 = sand.u32 %s63, 1
        %s173 = scalar_lea.sflag [#allocation6], %s172
        %s174 = sand.u32 %s63, 1
        %s175 = smul.addr %s174, 96
        %s176 = scalar_lea.vmem [#allocation5], %s175
        // Predicated region
        $region33: #{tpu_custom_call.1} parent=27 // pred_check
          %p177 = pneg %p76
        $region34: #{tpu_custom_call.1} parent=27 // pred_check_branch
          %179 = sbr.rel (%p177) target = $region36
        $region35: #{tpu_custom_call.1} parent=27 // pred_region
          %181 = dma.done %s173, 1536
        $region36: #{tpu_custom_call.1} parent=27 // pred_fallthru
          _
        %p182 = pneg %p48
        %p183 = pneg %p45
        %s184 = sand.u32 %s63, 1
        %s185 = scalar_lea.sflag [#allocation6], %s184
        %s186 = sand.u32 %s63, 1
        %s187 = smul.addr %s186, 96
        %s188 = scalar_lea.vmem [#allocation5], %s187
        %p189 = pneg %p76
        %p190 = pneg %p73
        %p191 = pneg %p104
        %p192 = pneg %p101
        %s193 = sand.u32 %s91, 1
        %s194 = scalar_lea.sflag [#allocation4], %s193
        %s195 = sand.u32 %s91, 1
        %s196 = smul.addr %s195, 96
        %s197 = scalar_lea.vmem [#allocation7], %s196
        %v198 = vld [vmem:[#allocation2] sm:$0xff]
        %v199 = vld [vmem:[#allocation2 + $0x8] sm:$0xff]
        %v200 = vld [vmem:[#allocation2 + $0x10] sm:$0xff]
        %v201 = vld [vmem:[#allocation2 + $0x18] sm:$0xff]
        %v202 = vld [vmem:[#allocation2 + $0x20] sm:$0xff]
        %v203 = vld [vmem:[#allocation2 + $0x28] sm:$0xff]
        %v204 = vld [vmem:[#allocation2 + $0x30] sm:$0xff]
        %v205 = vld [vmem:[#allocation2 + $0x38] sm:$0xff]
        %v206 = vld [vmem:[#allocation2 + $0x40] sm:$0xff]
        %v207 = vld [vmem:[#allocation2 + $0x48] sm:$0xff]
        %v208 = vld [vmem:[#allocation2 + $0x50] sm:$0xff]
        %v209 = vld [vmem:[#allocation2 + $0x58] sm:$0xff]
        %v210 = vld [vmem:[%s176] sm:$0xff]
        %v211 = vld [vmem:[%s176 + $0x8] sm:$0xff]
        %v212 = vld [vmem:[%s176 + $0x10] sm:$0xff]
        %v213 = vld [vmem:[%s176 + $0x18] sm:$0xff]
        %v214 = vld [vmem:[%s176 + $0x20] sm:$0xff]
        %v215 = vld [vmem:[%s176 + $0x28] sm:$0xff]
        %v216 = vld [vmem:[%s176 + $0x30] sm:$0xff]
        %v217 = vld [vmem:[%s176 + $0x38] sm:$0xff]
        %v218 = vld [vmem:[%s176 + $0x40] sm:$0xff]
        %v219 = vld [vmem:[%s176 + $0x48] sm:$0xff]
        %v220 = vld [vmem:[%s176 + $0x50] sm:$0xff]
        %v221 = vld [vmem:[%s176 + $0x58] sm:$0xff]
        %vm222 = vcmask 785408
        %v224 = vsel %vm222, %v198, 0
        %v227 = vsel %vm222, %v199, 0
        %v230 = vsel %vm222, %v200, 0
        %v233 = vsel %vm222, %v201, 0
        %v236 = vsel %vm222, %v202, 0
        %v239 = vsel %vm222, %v203, 0
        %v242 = vsel %vm222, %v204, 0
        %v245 = vsel %vm222, %v205, 0
        %v248 = vsel %vm222, %v206, 0
        %v251 = vsel %vm222, %v207, 0
        %v254 = vsel %vm222, %v208, 0
        %v257 = vsel %vm222, %v209, 0
        %259 = vmatpush.msra.mxu0 0.0
        %260 = vmatpush.msra.mxu0 0.0
        %261 = vmatpush.msra.mxu0 0.0
        %262 = vmatpush.msra.mxu0 0.0
        %263 = vmatpush.msra.mxu0 %v221
        %264 = vmatpush.msra.mxu0 %v220
        %265 = vmatpush.msra.mxu0 %v219
        %266 = vmatpush.msra.mxu0 %v218
        %267 = vmatpush.msra.mxu0 %v217
        %268 = vmatpush.msra.mxu0 %v216
        %269 = vmatpush.msra.mxu0 %v215
        %270 = vmatpush.msra.mxu0 %v214
        %271 = vmatpush.msra.mxu0 %v213
        %272 = vmatpush.msra.mxu0 %v212
        %273 = vmatpush.msra.mxu0 %v211
        %274 = vmatpush.msra.mxu0 %v210
        %275 = vmatmul.f32.gmra.mxu0 %v224
        %v276 = vpop.f32.mrf.mxu0
        %v277 = vadd.f32 0.0, %v276
        %278 = vmatmul.f32.gmra.mxu0 %v227
        %v279 = vpop.f32.mrf.mxu0
        %v280 = vadd.f32 0.0, %v279
        %281 = vmatmul.f32.gmra.mxu0 %v230
        %v282 = vpop.f32.mrf.mxu0
        %v283 = vadd.f32 0.0, %v282
        %284 = vmatmul.f32.gmra.mxu0 %v233
        %v285 = vpop.f32.mrf.mxu0
        %v286 = vadd.f32 0.0, %v285
        %287 = vmatmul.f32.gmra.mxu0 %v236
        %v288 = vpop.f32.mrf.mxu0
        %v289 = vadd.f32 0.0, %v288
        %290 = vmatmul.f32.gmra.mxu0 %v239
        %v291 = vpop.f32.mrf.mxu0
        %v292 = vadd.f32 0.0, %v291
        %293 = vmatmul.f32.gmra.mxu0 %v242
        %v294 = vpop.f32.mrf.mxu0
        %v295 = vadd.f32 0.0, %v294
        %296 = vmatmul.f32.gmra.mxu0 %v245
        %v297 = vpop.f32.mrf.mxu0
        %v298 = vadd.f32 0.0, %v297
        %299 = vmatmul.f32.gmra.mxu0 %v248
        %v300 = vpop.f32.mrf.mxu0
        %v301 = vadd.f32 0.0, %v300
        %302 = vmatmul.f32.gmra.mxu0 %v251
        %v303 = vpop.f32.mrf.mxu0
        %v304 = vadd.f32 0.0, %v303
        %305 = vmatmul.f32.gmra.mxu0 %v254
        %v306 = vpop.f32.mrf.mxu0
        %v307 = vadd.f32 0.0, %v306
        %308 = vmatmul.f32.gmra.mxu0 %v257
        %v309 = vpop.f32.mrf.mxu0
        %v310 = vadd.f32 0.0, %v309
        %311 = vdwg.mxu0
        %312 = vst [vmem:[%s197] sm:$0xff] %v277
        %313 = vst [vmem:[%s197 + $0x8] sm:$0xff] %v280
        %314 = vst [vmem:[%s197 + $0x10] sm:$0xff] %v283
        %315 = vst [vmem:[%s197 + $0x18] sm:$0xff] %v286
        %316 = vst [vmem:[%s197 + $0x20] sm:$0xff] %v289
        %317 = vst [vmem:[%s197 + $0x28] sm:$0xff] %v292
        %318 = vst [vmem:[%s197 + $0x30] sm:$0xff] %v295
        %319 = vst [vmem:[%s197 + $0x38] sm:$0xff] %v298
        %320 = vst [vmem:[%s197 + $0x40] sm:$0xff] %v301
        %321 = vst [vmem:[%s197 + $0x48] sm:$0xff] %v304
        %322 = vst [vmem:[%s197 + $0x50] sm:$0xff] %v307
        %323 = vst [vmem:[%s197 + $0x58] sm:$0xff] %v310
        %s324 = sand.u32 %s91, 1
        %s325 = scalar_lea.sflag [#allocation4], %s324
        %s326 = sand.u32 %s91, 1
        %s327 = smul.addr %s326, 96
        %s328 = scalar_lea.vmem [#allocation7], %s327
        // Predicated region
        $region37: #{tpu_custom_call.1} parent=27 // pred_check
          %p329 = pneg %p101
        $region38: #{tpu_custom_call.1} parent=27 // pred_check_branch
          %331 = sbr.rel (%p329) target = $region40
        $region39: #{tpu_custom_call.1} parent=27 // pred_region
          %333 = vsyncadd %s325, 0
          %s334 = smul.addr %s24, 12
          %s335 = sadd.s32 %s25, %s334
          %s336 = smul.addr %s335, 8
          %s337 = scalar_lea.hbm %s2, %s336
          %s338 = sshll.u32 %s328, 4
          %s339 = int_to_ptr.vmem [resolvable:$true] %s338
          %s340 = sshll.u32 %s337, 4
          %s341 = int_to_ptr.hbm [resolvable:$true] %s340
          %346 = dma.vmem_to_hbm [thread:$0]  %s339, 1536, %s341, %s325, 128, 128, 8
        $region40: #{tpu_custom_call.1} parent=27 // pred_fallthru
          _
      $region28: #{tpu_custom_call.1} parent=5 // pred_fallthru
        _
      %p347 = scmp.le.s32.totalorder 2, %s15
      // Predicated region
      $region41: #{tpu_custom_call.1} parent=5 // pred_check
        %p348 = pneg %p347
      $region42: #{tpu_custom_call.1} parent=5 // pred_check_branch
        %350 = sbr.rel (%p348) target = $region44
      $region43: #{tpu_custom_call.1} parent=5 // pred_region
        %s351 = ssub.s32 %s15, 2
        // Predicated region
        $region45: #{tpu_custom_call.1} parent=43 // pred_check
          %p352 = pneg %p107
        $region46: #{tpu_custom_call.1} parent=43 // pred_check_branch
          %354 = sbr.rel (%p352) target = $region48
        $region47: #{tpu_custom_call.1} parent=43 // pred_region
          %s355 = sand.u32 %s92, 1
          %s356 = scalar_lea.sflag [#allocation4], %s355
          %s357 = sand.u32 %s92, 1
          %s358 = smul.addr %s357, 96
          %s359 = scalar_lea.vmem [#allocation7], %s358
          %361 = dma.done %s356, 1536
        $region48: #{tpu_custom_call.1} parent=43 // pred_fallthru
          _
      $region44: #{tpu_custom_call.1} parent=5 // pred_fallthru
        _
    $region6: #{tpu_custom_call.1} parent=1 // loop_footer
      %s19 = sadd.s32 1, %s15
    $region7: #{tpu_custom_call.1} parent=1 // loop_footer_branch
      %14 = sbr.rel target = $region3
    $region8: #{tpu_custom_call.1} parent=1 // loop_exit
      _
    %362 = vsyncpa [#allocation3], 1
    %s363 = scalar_lea.sflag [#allocation3], 1
    %364 = vsyncpa %s363, 1
    %365 = vsyncpa [#allocation6], 1
    %s366 = scalar_lea.sflag [#allocation6], 1
    %367 = vsyncpa %s366, 1
    %368 = vsyncpa [#allocation4], 1
    %s369 = scalar_lea.sflag [#allocation4], 1
    %370 = vsyncpa %s369, 1

</llo_original>
